<compile_context>
chip_gen: v7x
topology: tpu7x:2x2x1
jax: 0.10.0
libtpu: 0.0.40
codegen_flags: <defaults>
</compile_context>

<pallas_src>
import numpy as np
import jax
import jax.numpy as jnp
from jax.experimental import pallas as pl
from jax.experimental.pallas import tpu as pltpu


# Byte budget for ONE emb input block (the pipeline double-buffers it => 2x in
# VMEM).  4 MiB/block amortizes the ~0.35 us per-step overhead even at v7x's
# 3.2 TB/s HBM (4 MiB read ~= 1.3 us), and 2*4 MiB + f32 out block + len block
# stays < 10 MiB, under every generation's scoped-VMEM default.
_EMB_BLOCK_BYTES = 4 << 20


def mean_embedding_kernel(len_ref, emb_ref, out_ref):
    """One (batch-tile, d-tile, seq-tile) grid step of the mean reduction.

    len_ref : (Bt, 1)      f32  sequence lengths (already cast to float)
    emb_ref : (Bt, Lt, Dt) in-dtype embedding tile (kept in input dtype)
    out_ref : (Bt, Dt)     f32  output block; resident across the seq axis
                                (index_map constant in l) => accumulator.
    """
    l = pl.program_id(2)

    @pl.when(l == 0)
    def _init():
        out_ref[...] = jnp.zeros_like(out_ref)

    # Partial sum over the sequence (sublane) axis, accumulated in f32 without
    # materializing a full f32 copy of the tile.
    out_ref[...] += jnp.sum(emb_ref[...], axis=1, dtype=jnp.float32)

    @pl.when(l == pl.num_programs(2) - 1)
    def _finalize():
        # Exact division (matches torch's summed / len_.float()).
        out_ref[...] = out_ref[...] / len_ref[...]


def _round_up(x, m):
    return (x + m - 1) // m * m


def _select_tiles(B, L, D, itemsize):
    """Pick (bt, lt, dt) so one emb block is ~_EMB_BLOCK_BYTES and tile-legal."""
    # Minimum sublane multiple for the emb block's second-minor dim (lt).
    sub = {4: 8, 2: 16, 1: 32}.get(itemsize, 8)

    # Sequence tile: as much of L as fits the budget at the minimum batch tile.
    lt = max(sub, (_EMB_BLOCK_BYTES // (8 * D * itemsize)) // sub * sub)
    lt = min(lt, _round_up(L, sub))

    # Batch tile: fill the remaining budget, multiple of 8 (f32 output block),
    # capped so the parallel batch axis keeps >= 2 steps when B > 8 (lets v7x
    # shard the grid across its 2 TensorCores).
    bt = max(8, (_EMB_BLOCK_BYTES // (lt * D * itemsize)) // 8 * 8)
    bt = min(bt, _round_up(pl.cdiv(B, 2), 8) if B > 8 else 8)

    # Embedding-dim tile: keep D whole (lane-dense) unless the batch axis can't
    # be split; then split D into two lane-aligned halves so there is still a
    # second "parallel" grid axis for v7x's two TensorCores.
    dt = D
    if B <= bt and D % 256 == 0:
        dt = D // 2
    return bt, lt, dt


def mean_embedding(emb, len_):
    """Pallas equivalent of MeanEmbedding.forward.

    emb : (..., L, D) float array
    len_: (...,)      int/float array (one length per leading index)
    returns (..., D) f32 = sum(emb, axis=-2) / len_[..., None].float()
    """
    lead = emb.shape[:-2]
    L, D = emb.shape[-2], emb.shape[-1]
    B = int(np.prod(lead)) if lead else 1

    emb3 = emb.reshape(B, L, D)
    len2 = len_.reshape(B, 1).astype(jnp.float32)   # PyTorch .float()

    itemsize = jnp.dtype(emb.dtype).itemsize
    bt, lt, dt = _select_tiles(B, L, D, itemsize)

    # Pad to tile multiples. Zero padding does not change the sum; padded batch
    # rows get len=1 (avoid 0/0) and are sliced off afterwards.
    B_pad = _round_up(B, bt)
    L_pad = _round_up(L, lt)
    if B_pad != B or L_pad != L:
        emb3 = jnp.pad(emb3, ((0, B_pad - B), (0, L_pad - L), (0, 0)))
    if B_pad != B:
        len2 = jnp.pad(len2, ((0, B_pad - B), (0, 0)), constant_values=1.0)

    grid = (B_pad // bt, D // dt, L_pad // lt)

    out = pl.pallas_call(
        mean_embedding_kernel,
        out_shape=jax.ShapeDtypeStruct((B_pad, D), jnp.float32),
        grid=grid,
        in_specs=[
            pl.BlockSpec((bt, 1), lambda b, d, l: (b, 0)),
            pl.BlockSpec((bt, lt, dt), lambda b, d, l: (b, l, d)),
        ],
        out_specs=pl.BlockSpec((bt, dt), lambda b, d, l: (b, d)),
        compiler_params=pltpu.CompilerParams(
            dimension_semantics=("parallel", "parallel", "arbitrary")),
    )(len2, emb3)

    if B_pad != B:
        out = out[:B]
    return out.reshape(*lead, D)


def mean_embedding_ref(emb, len_):
    """Pure-JAX reference (f32 accumulation, like torch's opmath for reductions)."""
    summed = jnp.sum(emb, axis=-2, dtype=jnp.float32)
    return summed / len_[..., None].astype(jnp.float32)


if __name__ == "__main__":
    mean_jit = jax.jit(mean_embedding)
    key = jax.random.PRNGKey(0)
    k1, k2, k3, k4 = jax.random.split(key, 4)

    # Case 1: aligned small shapes (B=8, L=256, D=128), f32.
    emb = jax.random.normal(k1, (8, 256, 128), dtype=jnp.float32)
    len_ = jnp.array([256, 200, 128, 64, 33, 17, 5, 1], dtype=jnp.int32)
    out = jax.block_until_ready(mean_jit(emb, len_))
    np.testing.assert_allclose(np.asarray(out),
                               np.asarray(mean_embedding_ref(emb, len_)),
                               rtol=1e-5, atol=1e-5)

    # Case 2: unaligned shapes (B=5, L=37) -> wrapper pads and slices.
    emb2 = jax.random.normal(k2, (5, 37, 128), dtype=jnp.float32)
    len2_ = jnp.array([37, 20, 10, 3, 1], dtype=jnp.int32)
    out2 = jax.block_until_ready(mean_jit(emb2, len2_))
    np.testing.assert_allclose(np.asarray(out2),
                               np.asarray(mean_embedding_ref(emb2, len2_)),
                               rtol=1e-5, atol=1e-5)

    # Case 3: multi-step grid (B=8, L=128, D=2048) -> nl=2 (accumulation over
    # the seq axis) and dt=1024 (D split because the batch axis has one step).
    emb3 = jax.random.normal(k3, (8, 128, 2048), dtype=jnp.float32)
    len3_ = jnp.array([128, 100, 64, 32, 16, 8, 2, 1], dtype=jnp.int32)
    out3 = jax.block_until_ready(mean_jit(emb3, len3_))
    np.testing.assert_allclose(np.asarray(out3),
                               np.asarray(mean_embedding_ref(emb3, len3_)),
                               rtol=1e-5, atol=1e-5)

    # Case 4: bf16 stream with leading batch dims (2, 3), L=24 (sub=16 tiling).
    emb4 = jax.random.normal(k4, (2, 3, 24, 128), dtype=jnp.bfloat16)
    len4_ = jnp.array([[24, 16, 8], [5, 2, 1]], dtype=jnp.int32)
    out4 = jax.block_until_ready(mean_jit(emb4, len4_))
    assert out4.shape == (2, 3, 128), out4.shape
    np.testing.assert_allclose(np.asarray(out4),
                               np.asarray(mean_embedding_ref(emb4, len4_)),
                               rtol=1e-4, atol=1e-4)

    print("KERNEL_OK")
</pallas_src>

<mosaic_0001>
module attributes {stable_mosaic.version = 11 : i64} {
  func.func @mean_embedding_kernel(%arg0: i32, %arg1: i32, %arg2: i32, %arg3: memref<8x1xf32, #tpu.memory_space<vmem>>, %arg4: memref<8x256x128xf32, #tpu.memory_space<vmem>>, %arg5: memref<8x128xf32, #tpu.memory_space<vmem>>) attributes {dimension_semantics = [#tpu.dimension_semantics<parallel>, #tpu.dimension_semantics<parallel>, #tpu.dimension_semantics<arbitrary>], iteration_bounds = array<i64: 1, 1, 1>, scalar_prefetch = 0 : i64, scratch_operands = 0 : i64, tpu.core_type = #tpu.core_type<tc>, window_params = [{transform_indices = @transform_0, window_bounds = array<i64: 8, 1>}, {transform_indices = @transform_1, window_bounds = array<i64: 8, 256, 128>}, {transform_indices = @transform_2, window_bounds = array<i64: 8, 128>}]} {
    %c0_i32 = arith.constant 0 : i32
    %0 = arith.cmpi eq, %arg2, %c0_i32 : i32
    %1 = arith.extui %0 : i1 to i32
    %c0_i32_0 = arith.constant 0 : i32
    %2 = arith.cmpi ne, %1, %c0_i32_0 : i32
    scf.if %2 {
      %cst_9 = arith.constant 0.000000e+00 : f32
      %11 = vector.broadcast %cst_9 : f32 to vector<8x128xf32>
      %c0_10 = arith.constant 0 : index
      %c0_11 = arith.constant 0 : index
      %12 = vector.load %arg5[%c0_10, %c0_11] : memref<8x128xf32, #tpu.memory_space<vmem>>, vector<8x128xf32>
      tpu.vector_store %arg5[%c0_10, %c0_11], %11 {strides = array<i32>} : memref<8x128xf32, #tpu.memory_space<vmem>>, vector<8x128xf32>,
    } else {
    }
    %c0 = arith.constant 0 : index
    %c0_1 = arith.constant 0 : index
    %3 = vector.load %arg5[%c0, %c0_1] : memref<8x128xf32, #tpu.memory_space<vmem>>, vector<8x128xf32>
    %c0_2 = arith.constant 0 : index
    %c0_3 = arith.constant 0 : index
    %c0_4 = arith.constant 0 : index
    %4 = vector.load %arg4[%c0_2, %c0_3, %c0_4] : memref<8x256x128xf32, #tpu.memory_space<vmem>>, vector<8x256x128xf32>
    %cst = arith.constant dense<0.000000e+00> : vector<8x128xf32>
    %5 = vector.multi_reduction <add>, %4, %cst [1] : vector<8x256x128xf32> to vector<8x128xf32>
    %6 = arith.addf %3, %5 : vector<8x128xf32>
    %c0_5 = arith.constant 0 : index
    %c0_6 = arith.constant 0 : index
    %7 = vector.load %arg5[%c0_5, %c0_6] : memref<8x128xf32, #tpu.memory_space<vmem>>, vector<8x128xf32>
    tpu.vector_store %arg5[%c0_5, %c0_6], %6 {strides = array<i32>} : memref<8x128xf32, #tpu.memory_space<vmem>>, vector<8x128xf32>,
    %c0_i32_7 = arith.constant 0 : i32
    %8 = arith.cmpi eq, %arg2, %c0_i32_7 : i32
    %9 = arith.extui %8 : i1 to i32
    %c0_i32_8 = arith.constant 0 : i32
    %10 = arith.cmpi ne, %9, %c0_i32_8 : i32
    scf.if %10 {
      %c0_9 = arith.constant 0 : index
      %c0_10 = arith.constant 0 : index
      %11 = vector.load %arg5[%c0_9, %c0_10] : memref<8x128xf32, #tpu.memory_space<vmem>>, vector<8x128xf32>
      %c0_11 = arith.constant 0 : index
      %c0_12 = arith.constant 0 : index
      %12 = vector.load %arg3[%c0_11, %c0_12] : memref<8x1xf32, #tpu.memory_space<vmem>>, vector<8x1xf32>
      %13 = vector.broadcast %12 : vector<8x1xf32> to vector<8x128xf32>
      %14 = arith.divf %11, %13 : vector<8x128xf32>
      %c0_13 = arith.constant 0 : index
      %c0_14 = arith.constant 0 : index
      %15 = vector.load %arg5[%c0_13, %c0_14] : memref<8x128xf32, #tpu.memory_space<vmem>>, vector<8x128xf32>
      tpu.vector_store %arg5[%c0_13, %c0_14], %14 {strides = array<i32>} : memref<8x128xf32, #tpu.memory_space<vmem>>, vector<8x128xf32>,
    } else {
    }
    return
  }
  func.func @transform_0(%arg0: i32, %arg1: i32, %arg2: i32) -> (i32, i32) {
    %c0_i32 = arith.constant 0 : i32
    %c0_i32_0 = arith.constant 0 : i32
    return %arg0, %c0_i32 : i32, i32
  }
  func.func @transform_1(%arg0: i32, %arg1: i32, %arg2: i32) -> (i32, i32, i32) {
    %c0_i32 = arith.constant 0 : i32
    return %arg0, %arg2, %arg1 : i32, i32, i32
  }
  func.func @transform_2(%arg0: i32, %arg1: i32, %arg2: i32) -> (i32, i32) {
    %c0_i32 = arith.constant 0 : i32
    return %arg0, %arg1 : i32, i32
  }
}

</mosaic_0001>

<llo_original>
// kernel: mean_embedding.1
$region0: #{mean_embedding.1}
  #allocation0 [shape = 'u32[]', space=smem, size = 0x4, offset = 0x4, fixed_abs, tag = 'smem constant byte address 0x4 - core index']
  #allocation1 [shape = 'u32[144,128]{1,0:T(1,128)}', space=vmem, size = 0x12000, scoped, tag = 'internal scratch']
  %s0 = inlined_call_operand.vmem [shape: f32[8,1], index: 0, kind: input, shape index: {}]
  %s1 = inlined_call_operand.hbm [shape: f32[8,256,128], index: 1, kind: input, shape index: {}]
  %s2 = inlined_call_operand.hbm [shape: f32[8,128], index: 2, kind: output, shape index: {}]
  %s3 = sld [smem:[#allocation0]]
  $region30: #{mean_embedding.1} parent=0
    _
  %s5 = ssub.s32 1, %s3
  %s6 = scalar_select 0, %s5, %s3
  $region1: #{mean_embedding.1} parent=0
    #allocation2 [shape = 'u8[1048576]{0}', space=vmem, size = 0x100000, scoped, tag = 'input window, operand 1, single buffered']
    #allocation3 [shape = 's32[1]{0}', space=sflag, size = 0x4, scoped, tag = 'scoped memory for mean_embedding.1']
    #allocation4 [shape = 's32[1]{0}', space=sflag, size = 0x4, scoped, tag = 'scoped memory for mean_embedding.1']
    #allocation5 [shape = 'u8[4096]{0}', space=vmem, size = 0x1000, scoped, tag = 'output window, operand 0, single buffered']
    %7 = vsyncpa [#allocation3], 0
    %8 = vsyncpa [#allocation4], 0
    // Predicated region
    $region2: #{mean_embedding.1} parent=1 // pred_check
      _
    $region3: #{mean_embedding.1} parent=1 // pred_check_branch
      %10 = sbr.rel (0) target = $region5
    $region4: #{mean_embedding.1} parent=1 // pred_region
      _
    $region5: #{mean_embedding.1} parent=1 // pred_fallthru
      _
    // Predicated region
    $region6: #{mean_embedding.1} parent=1 // pred_check
      _
    $region7: #{mean_embedding.1} parent=1 // pred_check_branch
      %12 = sbr.rel (0) target = $region9
    $region8: #{mean_embedding.1} parent=1 // pred_region
      %s14 = ssub.s32 32768, 32768
      %15 = vsyncadd [#allocation3], %s14
      %s16 = sshll.u32 [#allocation2], 4
      %s17 = int_to_ptr.vmem [resolvable:$true] %s16
      %22 = dma.hbm_to_vmem [thread:$0]  %s1, 32768, %s17, [#allocation3], 128, 128, 8
    $region9: #{mean_embedding.1} parent=1 // pred_fallthru
      _
    // Predicated region
    $region10: #{mean_embedding.1} parent=1 // pred_check
      _
    $region11: #{mean_embedding.1} parent=1 // pred_check_branch
      %24 = sbr.rel (0) target = $region13
    $region12: #{mean_embedding.1} parent=1 // pred_region
      %25 = dma.done [#allocation3], 32768
    $region13: #{mean_embedding.1} parent=1 // pred_fallthru
      _
    %p26 = scmp.eq.s32.totalorder 0, 0
    // Predicated region
    $region14: #{mean_embedding.1} parent=1 // pred_check
      %p27 = pneg %p26
    $region15: #{mean_embedding.1} parent=1 // pred_check_branch
      %29 = sbr.rel (%p27) target = $region17
    $region16: #{mean_embedding.1} parent=1 // pred_region
      %30 = vst [vmem:[#allocation5] sm:$0xff] 0.0
    $region17: #{mean_embedding.1} parent=1 // pred_fallthru
      _
    %v31 = vld [vmem:[#allocation5] sm:$0xff]
    %v32 = vld [vmem:[#allocation2] sm:$0xff]
    %v33 = vld [vmem:[#allocation2 + $0x8] sm:$0xff]
    %v34 = vld [vmem:[#allocation2 + $0x10] sm:$0xff]
    %v35 = vld [vmem:[#allocation2 + $0x18] sm:$0xff]
    %v36 = vld [vmem:[#allocation2 + $0x20] sm:$0xff]
    %v37 = vld [vmem:[#allocation2 + $0x28] sm:$0xff]
    %v38 = vld [vmem:[#allocation2 + $0x30] sm:$0xff]
    %v39 = vld [vmem:[#allocation2 + $0x38] sm:$0xff]
    %v40 = vld [vmem:[#allocation2 + $0x40] sm:$0xff]
    %v41 = vld [vmem:[#allocation2 + $0x48] sm:$0xff]
    %v42 = vld [vmem:[#allocation2 + $0x50] sm:$0xff]
    %v43 = vld [vmem:[#allocation2 + $0x58] sm:$0xff]
    %v44 = vld [vmem:[#allocation2 + $0x60] sm:$0xff]
    %v45 = vld [vmem:[#allocation2 + $0x68] sm:$0xff]
    %v46 = vld [vmem:[#allocation2 + $0x70] sm:$0xff]
    %v47 = vld [vmem:[#allocation2 + $0x78] sm:$0xff]
    %v48 = vld [vmem:[#allocation2 + $0x80] sm:$0xff]
    %v49 = vld [vmem:[#allocation2 + $0x88] sm:$0xff]
    %v50 = vld [vmem:[#allocation2 + $0x90] sm:$0xff]
    %v51 = vld [vmem:[#allocation2 + $0x98] sm:$0xff]
    %v52 = vld [vmem:[#allocation2 + $0xa0] sm:$0xff]
    %v53 = vld [vmem:[#allocation2 + $0xa8] sm:$0xff]
    %v54 = vld [vmem:[#allocation2 + $0xb0] sm:$0xff]
    %v55 = vld [vmem:[#allocation2 + $0xb8] sm:$0xff]
    %v56 = vld [vmem:[#allocation2 + $0xc0] sm:$0xff]
    %v57 = vld [vmem:[#allocation2 + $0xc8] sm:$0xff]
    %v58 = vld [vmem:[#allocation2 + $0xd0] sm:$0xff]
    %v59 = vld [vmem:[#allocation2 + $0xd8] sm:$0xff]
    %v60 = vld [vmem:[#allocation2 + $0xe0] sm:$0xff]
    %v61 = vld [vmem:[#allocation2 + $0xe8] sm:$0xff]
    %v62 = vld [vmem:[#allocation2 + $0xf0] sm:$0xff]
    %v63 = vld [vmem:[#allocation2 + $0xf8] sm:$0xff]
    %v64 = vld [vmem:[#allocation2 + $0x100] sm:$0xff]
    %v65 = vld [vmem:[#allocation2 + $0x108] sm:$0xff]
    %v66 = vld [vmem:[#allocation2 + $0x110] sm:$0xff]
    %v67 = vld [vmem:[#allocation2 + $0x118] sm:$0xff]
    %v68 = vld [vmem:[#allocation2 + $0x120] sm:$0xff]
    %v69 = vld [vmem:[#allocation2 + $0x128] sm:$0xff]
    %v70 = vld [vmem:[#allocation2 + $0x130] sm:$0xff]
    %v71 = vld [vmem:[#allocation2 + $0x138] sm:$0xff]
    %v72 = vld [vmem:[#allocation2 + $0x140] sm:$0xff]
    %v73 = vld [vmem:[#allocation2 + $0x148] sm:$0xff]
    %v74 = vld [vmem:[#allocation2 + $0x150] sm:$0xff]
    %v75 = vld [vmem:[#allocation2 + $0x158] sm:$0xff]
    %v76 = vld [vmem:[#allocation2 + $0x160] sm:$0xff]
    %v77 = vld [vmem:[#allocation2 + $0x168] sm:$0xff]
    %v78 = vld [vmem:[#allocation2 + $0x170] sm:$0xff]
    %v79 = vld [vmem:[#allocation2 + $0x178] sm:$0xff]
    %v80 = vld [vmem:[#allocation2 + $0x180] sm:$0xff]
    %v81 = vld [vmem:[#allocation2 + $0x188] sm:$0xff]
    %v82 = vld [vmem:[#allocation2 + $0x190] sm:$0xff]
    %v83 = vld [vmem:[#allocation2 + $0x198] sm:$0xff]
    %v84 = vld [vmem:[#allocation2 + $0x1a0] sm:$0xff]
    %v85 = vld [vmem:[#allocation2 + $0x1a8] sm:$0xff]
    %v86 = vld [vmem:[#allocation2 + $0x1b0] sm:$0xff]
    %v87 = vld [vmem:[#allocation2 + $0x1b8] sm:$0xff]
    %v88 = vld [vmem:[#allocation2 + $0x1c0] sm:$0xff]
    %v89 = vld [vmem:[#allocation2 + $0x1c8] sm:$0xff]
    %v90 = vld [vmem:[#allocation2 + $0x1d0] sm:$0xff]
    %v91 = vld [vmem:[#allocation2 + $0x1d8] sm:$0xff]
    %v92 = vld [vmem:[#allocation2 + $0x1e0] sm:$0xff]
    %v93 = vld [vmem:[#allocation2 + $0x1e8] sm:$0xff]
    %v94 = vld [vmem:[#allocation2 + $0x1f0] sm:$0xff]
    %v95 = vld [vmem:[#allocation2 + $0x1f8] sm:$0xff]
    %v96 = vld [vmem:[#allocation2 + $0x200] sm:$0xff]
    %v97 = vld [vmem:[#allocation2 + $0x208] sm:$0xff]
    %v98 = vld [vmem:[#allocation2 + $0x210] sm:$0xff]
    %v99 = vld [vmem:[#allocation2 + $0x218] sm:$0xff]
    %v100 = vld [vmem:[#allocation2 + $0x220] sm:$0xff]
    %v101 = vld [vmem:[#allocation2 + $0x228] sm:$0xff]
    %v102 = vld [vmem:[#allocation2 + $0x230] sm:$0xff]
    %v103 = vld [vmem:[#allocation2 + $0x238] sm:$0xff]
    %v104 = vld [vmem:[#allocation2 + $0x240] sm:$0xff]
    %v105 = vld [vmem:[#allocation2 + $0x248] sm:$0xff]
    %v106 = vld [vmem:[#allocation2 + $0x250] sm:$0xff]
    %v107 = vld [vmem:[#allocation2 + $0x258] sm:$0xff]
    %v108 = vld [vmem:[#allocation2 + $0x260] sm:$0xff]
    %v109 = vld [vmem:[#allocation2 + $0x268] sm:$0xff]
    %v110 = vld [vmem:[#allocation2 + $0x270] sm:$0xff]
    %v111 = vld [vmem:[#allocation2 + $0x278] sm:$0xff]
    %v112 = vld [vmem:[#allocation2 + $0x280] sm:$0xff]
    %v113 = vld [vmem:[#allocation2 + $0x288] sm:$0xff]
    %v114 = vld [vmem:[#allocation2 + $0x290] sm:$0xff]
    %v115 = vld [vmem:[#allocation2 + $0x298] sm:$0xff]
    %v116 = vld [vmem:[#allocation2 + $0x2a0] sm:$0xff]
    %v117 = vld [vmem:[#allocation2 + $0x2a8] sm:$0xff]
    %v118 = vld [vmem:[#allocation2 + $0x2b0] sm:$0xff]
    %v119 = vld [vmem:[#allocation2 + $0x2b8] sm:$0xff]
    %v120 = vld [vmem:[#allocation2 + $0x2c0] sm:$0xff]
    %v121 = vld [vmem:[#allocation2 + $0x2c8] sm:$0xff]
    %v122 = vld [vmem:[#allocation2 + $0x2d0] sm:$0xff]
    %v123 = vld [vmem:[#allocation2 + $0x2d8] sm:$0xff]
    %v124 = vld [vmem:[#allocation2 + $0x2e0] sm:$0xff]
    %v125 = vld [vmem:[#allocation2 + $0x2e8] sm:$0xff]
    %v126 = vld [vmem:[#allocation2 + $0x2f0] sm:$0xff]
    %v127 = vld [vmem:[#allocation2 + $0x2f8] sm:$0xff]
    %v128 = vld [vmem:[#allocation2 + $0x300] sm:$0xff]
    %v129 = vld [vmem:[#allocation2 + $0x308] sm:$0xff]
    %v130 = vld [vmem:[#allocation2 + $0x310] sm:$0xff]
    %v131 = vld [vmem:[#allocation2 + $0x318] sm:$0xff]
    %v132 = vld [vmem:[#allocation2 + $0x320] sm:$0xff]
    %v133 = vld [vmem:[#allocation2 + $0x328] sm:$0xff]
    %v134 = vld [vmem:[#allocation2 + $0x330] sm:$0xff]
    %v135 = vld [vmem:[#allocation2 + $0x338] sm:$0xff]
    %v136 = vld [vmem:[#allocation2 + $0x340] sm:$0xff]
    %v137 = vld [vmem:[#allocation2 + $0x348] sm:$0xff]
    %v138 = vld [vmem:[#allocation2 + $0x350] sm:$0xff]
    %v139 = vld [vmem:[#allocation2 + $0x358] sm:$0xff]
    %v140 = vld [vmem:[#allocation2 + $0x360] sm:$0xff]
    %v141 = vld [vmem:[#allocation2 + $0x368] sm:$0xff]
    %v142 = vld [vmem:[#allocation2 + $0x370] sm:$0xff]
    %v143 = vld [vmem:[#allocation2 + $0x378] sm:$0xff]
    %v144 = vld [vmem:[#allocation2 + $0x380] sm:$0xff]
    %v145 = vld [vmem:[#allocation2 + $0x388] sm:$0xff]
    %v146 = vld [vmem:[#allocation2 + $0x390] sm:$0xff]
    %v147 = vld [vmem:[#allocation2 + $0x398] sm:$0xff]
    %v148 = vld [vmem:[#allocation2 + $0x3a0] sm:$0xff]
    %v149 = vld [vmem:[#allocation2 + $0x3a8] sm:$0xff]
    %v150 = vld [vmem:[#allocation2 + $0x3b0] sm:$0xff]
    %v151 = vld [vmem:[#allocation2 + $0x3b8] sm:$0xff]
    %v152 = vld [vmem:[#allocation2 + $0x3c0] sm:$0xff]
    %v153 = vld [vmem:[#allocation2 + $0x3c8] sm:$0xff]
    %v154 = vld [vmem:[#allocation2 + $0x3d0] sm:$0xff]
    %v155 = vld [vmem:[#allocation2 + $0x3d8] sm:$0xff]
    %v156 = vld [vmem:[#allocation2 + $0x3e0] sm:$0xff]
    %v157 = vld [vmem:[#allocation2 + $0x3e8] sm:$0xff]
    %v158 = vld [vmem:[#allocation2 + $0x3f0] sm:$0xff]
    %v159 = vld [vmem:[#allocation2 + $0x3f8] sm:$0xff]
    %v160 = vld [vmem:[#allocation2 + $0x400] sm:$0xff]
    %v161 = vld [vmem:[#allocation2 + $0x408] sm:$0xff]
    %v162 = vld [vmem:[#allocation2 + $0x410] sm:$0xff]
    %v163 = vld [vmem:[#allocation2 + $0x418] sm:$0xff]
    %v164 = vld [vmem:[#allocation2 + $0x420] sm:$0xff]
    %v165 = vld [vmem:[#allocation2 + $0x428] sm:$0xff]
    %v166 = vld [vmem:[#allocation2 + $0x430] sm:$0xff]
    %v167 = vld [vmem:[#allocation2 + $0x438] sm:$0xff]
    %v168 = vld [vmem:[#allocation2 + $0x440] sm:$0xff]
    %v169 = vld [vmem:[#allocation2 + $0x448] sm:$0xff]
    %v170 = vld [vmem:[#allocation2 + $0x450] sm:$0xff]
    %v171 = vld [vmem:[#allocation2 + $0x458] sm:$0xff]
    %v172 = vld [vmem:[#allocation2 + $0x460] sm:$0xff]
    %v173 = vld [vmem:[#allocation2 + $0x468] sm:$0xff]
    %v174 = vld [vmem:[#allocation2 + $0x470] sm:$0xff]
    %v175 = vld [vmem:[#allocation2 + $0x478] sm:$0xff]
    %v176 = vld [vmem:[#allocation2 + $0x480] sm:$0xff]
    %v177 = vld [vmem:[#allocation2 + $0x488] sm:$0xff]
    %v178 = vld [vmem:[#allocation2 + $0x490] sm:$0xff]
    %v179 = vld [vmem:[#allocation2 + $0x498] sm:$0xff]
    %v180 = vld [vmem:[#allocation2 + $0x4a0] sm:$0xff]
    %v181 = vld [vmem:[#allocation2 + $0x4a8] sm:$0xff]
    %v182 = vld [vmem:[#allocation2 + $0x4b0] sm:$0xff]
    %v183 = vld [vmem:[#allocation2 + $0x4b8] sm:$0xff]
    %v184 = vld [vmem:[#allocation2 + $0x4c0] sm:$0xff]
    %v185 = vld [vmem:[#allocation2 + $0x4c8] sm:$0xff]
    %v186 = vld [vmem:[#allocation2 + $0x4d0] sm:$0xff]
    %v187 = vld [vmem:[#allocation2 + $0x4d8] sm:$0xff]
    %v188 = vld [vmem:[#allocation2 + $0x4e0] sm:$0xff]
    %v189 = vld [vmem:[#allocation2 + $0x4e8] sm:$0xff]
    %v190 = vld [vmem:[#allocation2 + $0x4f0] sm:$0xff]
    %v191 = vld [vmem:[#allocation2 + $0x4f8] sm:$0xff]
    %v192 = vld [vmem:[#allocation2 + $0x500] sm:$0xff]
    %v193 = vld [vmem:[#allocation2 + $0x508] sm:$0xff]
    %v194 = vld [vmem:[#allocation2 + $0x510] sm:$0xff]
    %v195 = vld [vmem:[#allocation2 + $0x518] sm:$0xff]
    %v196 = vld [vmem:[#allocation2 + $0x520] sm:$0xff]
    %v197 = vld [vmem:[#allocation2 + $0x528] sm:$0xff]
    %v198 = vld [vmem:[#allocation2 + $0x530] sm:$0xff]
    %v199 = vld [vmem:[#allocation2 + $0x538] sm:$0xff]
    %v200 = vld [vmem:[#allocation2 + $0x540] sm:$0xff]
    %v201 = vld [vmem:[#allocation2 + $0x548] sm:$0xff]
    %v202 = vld [vmem:[#allocation2 + $0x550] sm:$0xff]
    %v203 = vld [vmem:[#allocation2 + $0x558] sm:$0xff]
    %v204 = vld [vmem:[#allocation2 + $0x560] sm:$0xff]
    %v205 = vld [vmem:[#allocation2 + $0x568] sm:$0xff]
    %v206 = vld [vmem:[#allocation2 + $0x570] sm:$0xff]
    %v207 = vld [vmem:[#allocation2 + $0x578] sm:$0xff]
    %v208 = vld [vmem:[#allocation2 + $0x580] sm:$0xff]
    %v209 = vld [vmem:[#allocation2 + $0x588] sm:$0xff]
    %v210 = vld [vmem:[#allocation2 + $0x590] sm:$0xff]
    %v211 = vld [vmem:[#allocation2 + $0x598] sm:$0xff]
    %v212 = vld [vmem:[#allocation2 + $0x5a0] sm:$0xff]
    %v213 = vld [vmem:[#allocation2 + $0x5a8] sm:$0xff]
    %v214 = vld [vmem:[#allocation2 + $0x5b0] sm:$0xff]
    %v215 = vld [vmem:[#allocation2 + $0x5b8] sm:$0xff]
    %v216 = vld [vmem:[#allocation2 + $0x5c0] sm:$0xff]
    %v217 = vld [vmem:[#allocation2 + $0x5c8] sm:$0xff]
    %v218 = vld [vmem:[#allocation2 + $0x5d0] sm:$0xff]
    %v219 = vld [vmem:[#allocation2 + $0x5d8] sm:$0xff]
    %v220 = vld [vmem:[#allocation2 + $0x5e0] sm:$0xff]
    %v221 = vld [vmem:[#allocation2 + $0x5e8] sm:$0xff]
    %v222 = vld [vmem:[#allocation2 + $0x5f0] sm:$0xff]
    %v223 = vld [vmem:[#allocation2 + $0x5f8] sm:$0xff]
    %v224 = vld [vmem:[#allocation2 + $0x600] sm:$0xff]
    %v225 = vld [vmem:[#allocation2 + $0x608] sm:$0xff]
    %v226 = vld [vmem:[#allocation2 + $0x610] sm:$0xff]
    %v227 = vld [vmem:[#allocation2 + $0x618] sm:$0xff]
    %v228 = vld [vmem:[#allocation2 + $0x620] sm:$0xff]
    %v229 = vld [vmem:[#allocation2 + $0x628] sm:$0xff]
    %v230 = vld [vmem:[#allocation2 + $0x630] sm:$0xff]
    %v231 = vld [vmem:[#allocation2 + $0x638] sm:$0xff]
    %v232 = vld [vmem:[#allocation2 + $0x640] sm:$0xff]
    %v233 = vld [vmem:[#allocation2 + $0x648] sm:$0xff]
    %v234 = vld [vmem:[#allocation2 + $0x650] sm:$0xff]
    %v235 = vld [vmem:[#allocation2 + $0x658] sm:$0xff]
    %v236 = vld [vmem:[#allocation2 + $0x660] sm:$0xff]
    %v237 = vld [vmem:[#allocation2 + $0x668] sm:$0xff]
    %v238 = vld [vmem:[#allocation2 + $0x670] sm:$0xff]
    %v239 = vld [vmem:[#allocation2 + $0x678] sm:$0xff]
    %v240 = vld [vmem:[#allocation2 + $0x680] sm:$0xff]
    %v241 = vld [vmem:[#allocation2 + $0x688] sm:$0xff]
    %v242 = vld [vmem:[#allocation2 + $0x690] sm:$0xff]
    %v243 = vld [vmem:[#allocation2 + $0x698] sm:$0xff]
    %v244 = vld [vmem:[#allocation2 + $0x6a0] sm:$0xff]
    %v245 = vld [vmem:[#allocation2 + $0x6a8] sm:$0xff]
    %v246 = vld [vmem:[#allocation2 + $0x6b0] sm:$0xff]
    %v247 = vld [vmem:[#allocation2 + $0x6b8] sm:$0xff]
    %v248 = vld [vmem:[#allocation2 + $0x6c0] sm:$0xff]
    %v249 = vld [vmem:[#allocation2 + $0x6c8] sm:$0xff]
    %v250 = vld [vmem:[#allocation2 + $0x6d0] sm:$0xff]
    %v251 = vld [vmem:[#allocation2 + $0x6d8] sm:$0xff]
    %v252 = vld [vmem:[#allocation2 + $0x6e0] sm:$0xff]
    %v253 = vld [vmem:[#allocation2 + $0x6e8] sm:$0xff]
    %v254 = vld [vmem:[#allocation2 + $0x6f0] sm:$0xff]
    %v255 = vld [vmem:[#allocation2 + $0x6f8] sm:$0xff]
    %v256 = vld [vmem:[#allocation2 + $0x700] sm:$0xff]
    %v257 = vld [vmem:[#allocation2 + $0x708] sm:$0xff]
    %v258 = vld [vmem:[#allocation2 + $0x710] sm:$0xff]
    %v259 = vld [vmem:[#allocation2 + $0x718] sm:$0xff]
    %v260 = vld [vmem:[#allocation2 + $0x720] sm:$0xff]
    %v261 = vld [vmem:[#allocation2 + $0x728] sm:$0xff]
    %v262 = vld [vmem:[#allocation2 + $0x730] sm:$0xff]
    %v263 = vld [vmem:[#allocation2 + $0x738] sm:$0xff]
    %v264 = vld [vmem:[#allocation2 + $0x740] sm:$0xff]
    %v265 = vld [vmem:[#allocation2 + $0x748] sm:$0xff]
    %v266 = vld [vmem:[#allocation2 + $0x750] sm:$0xff]
    %v267 = vld [vmem:[#allocation2 + $0x758] sm:$0xff]
    %v268 = vld [vmem:[#allocation2 + $0x760] sm:$0xff]
    %v269 = vld [vmem:[#allocation2 + $0x768] sm:$0xff]
    %v270 = vld [vmem:[#allocation2 + $0x770] sm:$0xff]
    %v271 = vld [vmem:[#allocation2 + $0x778] sm:$0xff]
    %v272 = vld [vmem:[#allocation2 + $0x780] sm:$0xff]
    %v273 = vld [vmem:[#allocation2 + $0x788] sm:$0xff]
    %v274 = vld [vmem:[#allocation2 + $0x790] sm:$0xff]
    %v275 = vld [vmem:[#allocation2 + $0x798] sm:$0xff]
    %v276 = vld [vmem:[#allocation2 + $0x7a0] sm:$0xff]
    %v277 = vld [vmem:[#allocation2 + $0x7a8] sm:$0xff]
    %v278 = vld [vmem:[#allocation2 + $0x7b0] sm:$0xff]
    %v279 = vld [vmem:[#allocation2 + $0x7b8] sm:$0xff]
    %v280 = vld [vmem:[#allocation2 + $0x7c0] sm:$0xff]
    %v281 = vld [vmem:[#allocation2 + $0x7c8] sm:$0xff]
    %v282 = vld [vmem:[#allocation2 + $0x7d0] sm:$0xff]
    %v283 = vld [vmem:[#allocation2 + $0x7d8] sm:$0xff]
    %v284 = vld [vmem:[#allocation2 + $0x7e0] sm:$0xff]
    %v285 = vld [vmem:[#allocation2 + $0x7e8] sm:$0xff]
    %v286 = vld [vmem:[#allocation2 + $0x7f0] sm:$0xff]
    %v287 = vld [vmem:[#allocation2 + $0x7f8] sm:$0xff]
    %v288 = vadd.f32 %v32, %v33
    %v289 = vadd.f32 %v288, %v34
    %v290 = vadd.f32 %v289, %v35
    %v291 = vadd.f32 %v290, %v36
    %v292 = vadd.f32 %v291, %v37
    %v293 = vadd.f32 %v292, %v38
    %v294 = vadd.f32 %v293, %v39
    %v295 = vadd.f32 %v294, %v40
    %v296 = vadd.f32 %v295, %v41
    %v297 = vadd.f32 %v296, %v42
    %v298 = vadd.f32 %v297, %v43
    %v299 = vadd.f32 %v298, %v44
    %v300 = vadd.f32 %v299, %v45
    %v301 = vadd.f32 %v300, %v46
    %v302 = vadd.f32 %v301, %v47
    %v303 = vadd.f32 %v302, %v48
    %v304 = vadd.f32 %v303, %v49
    %v305 = vadd.f32 %v304, %v50
    %v306 = vadd.f32 %v305, %v51
    %v307 = vadd.f32 %v306, %v52
    %v308 = vadd.f32 %v307, %v53
    %v309 = vadd.f32 %v308, %v54
    %v310 = vadd.f32 %v309, %v55
    %v311 = vadd.f32 %v310, %v56
    %v312 = vadd.f32 %v311, %v57
    %v313 = vadd.f32 %v312, %v58
    %v314 = vadd.f32 %v313, %v59
    %v315 = vadd.f32 %v314, %v60
    %v316 = vadd.f32 %v315, %v61
    %v317 = vadd.f32 %v316, %v62
    %v318 = vadd.f32 %v317, %v63
    %v319 = vrot.slane %v318, 4
    %v320 = vadd.f32 %v318, %v319
    %v321 = vrot.slane %v320, 2
    %v322 = vadd.f32 %v320, %v321
    %v323 = vrot.slane %v322, 1
    %v324 = vadd.f32 %v322, %v323
    %v325 = vadd.f32 %v64, %v65
    %v326 = vadd.f32 %v325, %v66
    %v327 = vadd.f32 %v326, %v67
    %v328 = vadd.f32 %v327, %v68
    %v329 = vadd.f32 %v328, %v69
    %v330 = vadd.f32 %v329, %v70
    %v331 = vadd.f32 %v330, %v71
    %v332 = vadd.f32 %v331, %v72
    %v333 = vadd.f32 %v332, %v73
    %v334 = vadd.f32 %v333, %v74
    %v335 = vadd.f32 %v334, %v75
    %v336 = vadd.f32 %v335, %v76
    %v337 = vadd.f32 %v336, %v77
    %v338 = vadd.f32 %v337, %v78
    %v339 = vadd.f32 %v338, %v79
    %v340 = vadd.f32 %v339, %v80
    %v341 = vadd.f32 %v340, %v81
    %v342 = vadd.f32 %v341, %v82
    %v343 = vadd.f32 %v342, %v83
    %v344 = vadd.f32 %v343, %v84
    %v345 = vadd.f32 %v344, %v85
    %v346 = vadd.f32 %v345, %v86
    %v347 = vadd.f32 %v346, %v87
    %v348 = vadd.f32 %v347, %v88
    %v349 = vadd.f32 %v348, %v89
    %v350 = vadd.f32 %v349, %v90
    %v351 = vadd.f32 %v350, %v91
    %v352 = vadd.f32 %v351, %v92
    %v353 = vadd.f32 %v352, %v93
    %v354 = vadd.f32 %v353, %v94
    %v355 = vadd.f32 %v354, %v95
    %v356 = vrot.slane %v355, 4
    %v357 = vadd.f32 %v355, %v356
    %v358 = vrot.slane %v357, 2
    %v359 = vadd.f32 %v357, %v358
    %v360 = vrot.slane %v359, 1
    %v361 = vadd.f32 %v359, %v360
    %v362 = vadd.f32 %v96, %v97
    %v363 = vadd.f32 %v362, %v98
    %v364 = vadd.f32 %v363, %v99
    %v365 = vadd.f32 %v364, %v100
    %v366 = vadd.f32 %v365, %v101
    %v367 = vadd.f32 %v366, %v102
    %v368 = vadd.f32 %v367, %v103
    %v369 = vadd.f32 %v368, %v104
    %v370 = vadd.f32 %v369, %v105
    %v371 = vadd.f32 %v370, %v106
    %v372 = vadd.f32 %v371, %v107
    %v373 = vadd.f32 %v372, %v108
    %v374 = vadd.f32 %v373, %v109
    %v375 = vadd.f32 %v374, %v110
    %v376 = vadd.f32 %v375, %v111
    %v377 = vadd.f32 %v376, %v112
    %v378 = vadd.f32 %v377, %v113
    %v379 = vadd.f32 %v378, %v114
    %v380 = vadd.f32 %v379, %v115
    %v381 = vadd.f32 %v380, %v116
    %v382 = vadd.f32 %v381, %v117
    %v383 = vadd.f32 %v382, %v118
    %v384 = vadd.f32 %v383, %v119
    %v385 = vadd.f32 %v384, %v120
    %v386 = vadd.f32 %v385, %v121
    %v387 = vadd.f32 %v386, %v122
    %v388 = vadd.f32 %v387, %v123
    %v389 = vadd.f32 %v388, %v124
    %v390 = vadd.f32 %v389, %v125
    %v391 = vadd.f32 %v390, %v126
    %v392 = vadd.f32 %v391, %v127
    %v393 = vrot.slane %v392, 4
    %v394 = vadd.f32 %v392, %v393
    %v395 = vrot.slane %v394, 2
    %v396 = vadd.f32 %v394, %v395
    %v397 = vrot.slane %v396, 1
    %v398 = vadd.f32 %v396, %v397
    %v399 = vadd.f32 %v128, %v129
    %v400 = vadd.f32 %v399, %v130
    %v401 = vadd.f32 %v400, %v131
    %v402 = vadd.f32 %v401, %v132
    %v403 = vadd.f32 %v402, %v133
    %v404 = vadd.f32 %v403, %v134
    %v405 = vadd.f32 %v404, %v135
    %v406 = vadd.f32 %v405, %v136
    %v407 = vadd.f32 %v406, %v137
    %v408 = vadd.f32 %v407, %v138
    %v409 = vadd.f32 %v408, %v139
    %v410 = vadd.f32 %v409, %v140
    %v411 = vadd.f32 %v410, %v141
    %v412 = vadd.f32 %v411, %v142
    %v413 = vadd.f32 %v412, %v143
    %v414 = vadd.f32 %v413, %v144
    %v415 = vadd.f32 %v414, %v145
    %v416 = vadd.f32 %v415, %v146
    %v417 = vadd.f32 %v416, %v147
    %v418 = vadd.f32 %v417, %v148
    %v419 = vadd.f32 %v418, %v149
    %v420 = vadd.f32 %v419, %v150
    %v421 = vadd.f32 %v420, %v151
    %v422 = vadd.f32 %v421, %v152
    %v423 = vadd.f32 %v422, %v153
    %v424 = vadd.f32 %v423, %v154
    %v425 = vadd.f32 %v424, %v155
    %v426 = vadd.f32 %v425, %v156
    %v427 = vadd.f32 %v426, %v157
    %v428 = vadd.f32 %v427, %v158
    %v429 = vadd.f32 %v428, %v159
    %v430 = vrot.slane %v429, 4
    %v431 = vadd.f32 %v429, %v430
    %v432 = vrot.slane %v431, 2
    %v433 = vadd.f32 %v431, %v432
    %v434 = vrot.slane %v433, 1
    %v435 = vadd.f32 %v433, %v434
    %v436 = vadd.f32 %v160, %v161
    %v437 = vadd.f32 %v436, %v162
    %v438 = vadd.f32 %v437, %v163
    %v439 = vadd.f32 %v438, %v164
    %v440 = vadd.f32 %v439, %v165
    %v441 = vadd.f32 %v440, %v166
    %v442 = vadd.f32 %v441, %v167
    %v443 = vadd.f32 %v442, %v168
    %v444 = vadd.f32 %v443, %v169
    %v445 = vadd.f32 %v444, %v170
    %v446 = vadd.f32 %v445, %v171
    %v447 = vadd.f32 %v446, %v172
    %v448 = vadd.f32 %v447, %v173
    %v449 = vadd.f32 %v448, %v174
    %v450 = vadd.f32 %v449, %v175
    %v451 = vadd.f32 %v450, %v176
    %v452 = vadd.f32 %v451, %v177
    %v453 = vadd.f32 %v452, %v178
    %v454 = vadd.f32 %v453, %v179
    %v455 = vadd.f32 %v454, %v180
    %v456 = vadd.f32 %v455, %v181
    %v457 = vadd.f32 %v456, %v182
    %v458 = vadd.f32 %v457, %v183
    %v459 = vadd.f32 %v458, %v184
    %v460 = vadd.f32 %v459, %v185
    %v461 = vadd.f32 %v460, %v186
    %v462 = vadd.f32 %v461, %v187
    %v463 = vadd.f32 %v462, %v188
    %v464 = vadd.f32 %v463, %v189
    %v465 = vadd.f32 %v464, %v190
    %v466 = vadd.f32 %v465, %v191
    %v467 = vrot.slane %v466, 4
    %v468 = vadd.f32 %v466, %v467
    %v469 = vrot.slane %v468, 2
    %v470 = vadd.f32 %v468, %v469
    %v471 = vrot.slane %v470, 1
    %v472 = vadd.f32 %v470, %v471
    %v473 = vadd.f32 %v192, %v193
    %v474 = vadd.f32 %v473, %v194
    %v475 = vadd.f32 %v474, %v195
    %v476 = vadd.f32 %v475, %v196
    %v477 = vadd.f32 %v476, %v197
    %v478 = vadd.f32 %v477, %v198
    %v479 = vadd.f32 %v478, %v199
    %v480 = vadd.f32 %v479, %v200
    %v481 = vadd.f32 %v480, %v201
    %v482 = vadd.f32 %v481, %v202
    %v483 = vadd.f32 %v482, %v203
    %v484 = vadd.f32 %v483, %v204
    %v485 = vadd.f32 %v484, %v205
    %v486 = vadd.f32 %v485, %v206
    %v487 = vadd.f32 %v486, %v207
    %v488 = vadd.f32 %v487, %v208
    %v489 = vadd.f32 %v488, %v209
    %v490 = vadd.f32 %v489, %v210
    %v491 = vadd.f32 %v490, %v211
    %v492 = vadd.f32 %v491, %v212
    %v493 = vadd.f32 %v492, %v213
    %v494 = vadd.f32 %v493, %v214
    %v495 = vadd.f32 %v494, %v215
    %v496 = vadd.f32 %v495, %v216
    %v497 = vadd.f32 %v496, %v217
    %v498 = vadd.f32 %v497, %v218
    %v499 = vadd.f32 %v498, %v219
    %v500 = vadd.f32 %v499, %v220
    %v501 = vadd.f32 %v500, %v221
    %v502 = vadd.f32 %v501, %v222
    %v503 = vadd.f32 %v502, %v223
    %v504 = vrot.slane %v503, 4
    %v505 = vadd.f32 %v503, %v504
    %v506 = vrot.slane %v505, 2
    %v507 = vadd.f32 %v505, %v506
    %v508 = vrot.slane %v507, 1
    %v509 = vadd.f32 %v507, %v508
    %v510 = vadd.f32 %v224, %v225
    %v511 = vadd.f32 %v510, %v226
    %v512 = vadd.f32 %v511, %v227
    %v513 = vadd.f32 %v512, %v228
    %v514 = vadd.f32 %v513, %v229
    %v515 = vadd.f32 %v514, %v230
    %v516 = vadd.f32 %v515, %v231
    %v517 = vadd.f32 %v516, %v232
    %v518 = vadd.f32 %v517, %v233
    %v519 = vadd.f32 %v518, %v234
    %v520 = vadd.f32 %v519, %v235
    %v521 = vadd.f32 %v520, %v236
    %v522 = vadd.f32 %v521, %v237
    %v523 = vadd.f32 %v522, %v238
    %v524 = vadd.f32 %v523, %v239
    %v525 = vadd.f32 %v524, %v240
    %v526 = vadd.f32 %v525, %v241
    %v527 = vadd.f32 %v526, %v242
    %v528 = vadd.f32 %v527, %v243
    %v529 = vadd.f32 %v528, %v244
    %v530 = vadd.f32 %v529, %v245
    %v531 = vadd.f32 %v530, %v246
    %v532 = vadd.f32 %v531, %v247
    %v533 = vadd.f32 %v532, %v248
    %v534 = vadd.f32 %v533, %v249
    %v535 = vadd.f32 %v534, %v250
    %v536 = vadd.f32 %v535, %v251
    %v537 = vadd.f32 %v536, %v252
    %v538 = vadd.f32 %v537, %v253
    %v539 = vadd.f32 %v538, %v254
    %v540 = vadd.f32 %v539, %v255
    %v541 = vrot.slane %v540, 4
    %v542 = vadd.f32 %v540, %v541
    %v543 = vrot.slane %v542, 2
    %v544 = vadd.f32 %v542, %v543
    %v545 = vrot.slane %v544, 1
    %v546 = vadd.f32 %v544, %v545
    %v547 = vadd.f32 %v256, %v257
    %v548 = vadd.f32 %v547, %v258
    %v549 = vadd.f32 %v548, %v259
    %v550 = vadd.f32 %v549, %v260
    %v551 = vadd.f32 %v550, %v261
    %v552 = vadd.f32 %v551, %v262
    %v553 = vadd.f32 %v552, %v263
    %v554 = vadd.f32 %v553, %v264
    %v555 = vadd.f32 %v554, %v265
    %v556 = vadd.f32 %v555, %v266
    %v557 = vadd.f32 %v556, %v267
    %v558 = vadd.f32 %v557, %v268
    %v559 = vadd.f32 %v558, %v269
    %v560 = vadd.f32 %v559, %v270
    %v561 = vadd.f32 %v560, %v271
    %v562 = vadd.f32 %v561, %v272
    %v563 = vadd.f32 %v562, %v273
    %v564 = vadd.f32 %v563, %v274
    %v565 = vadd.f32 %v564, %v275
    %v566 = vadd.f32 %v565, %v276
    %v567 = vadd.f32 %v566, %v277
    %v568 = vadd.f32 %v567, %v278
    %v569 = vadd.f32 %v568, %v279
    %v570 = vadd.f32 %v569, %v280
    %v571 = vadd.f32 %v570, %v281
    %v572 = vadd.f32 %v571, %v282
    %v573 = vadd.f32 %v572, %v283
    %v574 = vadd.f32 %v573, %v284
    %v575 = vadd.f32 %v574, %v285
    %v576 = vadd.f32 %v575, %v286
    %v577 = vadd.f32 %v576, %v287
    %v578 = vrot.slane %v577, 4
    %v579 = vadd.f32 %v577, %v578
    %v580 = vrot.slane %v579, 2
    %v581 = vadd.f32 %v579, %v580
    %v582 = vrot.slane %v581, 1
    %v583 = vadd.f32 %v581, %v582
    %vm592 = vcmask 1041409
    %v593 = vsel %vm592, %v361, %v324
    %vm594 = vcmask 1042434
    %v595 = vsel %vm594, %v398, %v593
    %vm596 = vcmask 1043459
    %v597 = vsel %vm596, %v435, %v595
    %vm598 = vcmask 1044484
    %v599 = vsel %vm598, %v472, %v597
    %vm600 = vcmask 1045509
    %v601 = vsel %vm600, %v509, %v599
    %vm602 = vcmask 1046534
    %v603 = vsel %vm602, %v546, %v601
    %vm604 = vcmask 1047559
    %v605 = vsel %vm604, %v583, %v603
    %v607 = vadd.f32 %v31, %v605
    %608 = vst [vmem:[#allocation5] sm:$0xff] %v607
    // Predicated region
    $region18: #{mean_embedding.1} parent=1 // pred_check
      %p609 = pneg %p26
    $region19: #{mean_embedding.1} parent=1 // pred_check_branch
      %611 = sbr.rel (%p609) target = $region21
    $region20: #{mean_embedding.1} parent=1 // pred_region
      %v612 = vld [vmem:[#allocation5] sm:$0xff]
      %v613 = vld [vmem:[%s0] sm:$0xff]
      %615 = vset.pattern.permute.xlu0 0
      %616 = vperm.xlu0 %615, %v613
      %v617 = vpop.permute.xlu0 %616
      %v619 = vrcp.pop %v617
      %v620 = vmul.f32 %v612, %v619
      %621 = vst [vmem:[#allocation5] sm:$0xff] %v620
    $region21: #{mean_embedding.1} parent=1 // pred_fallthru
      _
    // Predicated region
    $region22: #{mean_embedding.1} parent=1 // pred_check
      _
    $region23: #{mean_embedding.1} parent=1 // pred_check_branch
      %623 = sbr.rel (0) target = $region25
    $region24: #{mean_embedding.1} parent=1 // pred_region
      %s625 = ssub.s32 128, 128
      %626 = vsyncadd [#allocation4], %s625
      %s628 = sshll.u32 [#allocation5], 4
      %s629 = int_to_ptr.vmem [resolvable:$true] %s628
      %631 = dma.vmem_to_hbm [thread:$0]  %s629, 128, %s2, [#allocation4]
    $region25: #{mean_embedding.1} parent=1 // pred_fallthru
      _
    // Predicated region
    $region26: #{mean_embedding.1} parent=1 // pred_check
      _
    $region27: #{mean_embedding.1} parent=1 // pred_check_branch
      %633 = sbr.rel (0) target = $region29
    $region28: #{mean_embedding.1} parent=1 // pred_region
      %634 = dma.done [#allocation4], 128
    $region29: #{mean_embedding.1} parent=1 // pred_fallthru
      _
    %635 = vsyncpa [#allocation3], 1
    %636 = vsyncpa [#allocation4], 1

</llo_original>
